<compile_context>
chip_gen: v7x
topology: tpu7x:2x2x1
jax: 0.10.0
libtpu: 0.0.40
codegen_flags: <defaults>
</compile_context>

<pallas_src>
import jax
import jax.numpy as jnp
from jax.experimental import pallas as pl
from jax.experimental.pallas import tpu as pltpu


_TARGET_BLOCK_BYTES = 4 << 20  # ~4 MiB blocks: ~86% of HBM roofline on f32 sweeps.


def _relu_kernel(x_ref, o_ref):
    x = x_ref[...]
    # Typed zero so integer inputs are not upcast by a weak float literal.
    o_ref[...] = jnp.maximum(x, jnp.zeros((), dtype=x.dtype))


def _chip_params():
    """(tensorcores_per_chip, physical_vmem_bytes) with safe fallbacks."""
    n_tc = 1
    vmem_bytes = 128 << 20
    try:
        info = pltpu.get_tpu_info()
        vmem_bytes = int(getattr(info, "vmem_capacity_bytes", vmem_bytes))
    except Exception:
        pass
    try:
        kind = getattr(jax.devices()[0], "device_kind", "").lower()
        # v7x / v4 / v5p expose 2 TensorCores per chip to the grid partitioner.
        if any(tag in kind for tag in ("v7", "v4", "v5p")):
            n_tc = 2
    except Exception:
        pass
    return n_tc, vmem_bytes


def _divisors(n):
    ds = set()
    i = 1
    while i * i <= n:
        if n % i == 0:
            ds.add(i)
            ds.add(n // i)
        i += 1
    return sorted(ds)


def _tile_rows_for(rows, cols, itemsize, pack, max_tile_bytes, n_tc):
    """Pick tile_rows for a (rows, cols) slab. Returns (tile_rows, exact_divisor)."""
    if rows <= pack:
        # Full-extent block: exempt from the (8,128) divisibility rule.
        return rows, True

    row_bytes = cols * itemsize
    target_rows = max(pack, min(rows, max_tile_bytes // row_bytes))
    target_rows = (target_rows // pack) * pack

    cands = [d for d in _divisors(rows) if d % pack == 0 and d <= target_rows]
    if cands:
        best = max(cands)
        if n_tc > 1:
            # Prefer an even step count >= 2 so both TensorCores get equal
            # halves, as long as the tile doesn't shrink by more than ~4x.
            even = [d for d in cands
                    if (rows // d) >= 2 and (rows // d) % 2 == 0]
            if even and max(even) >= max(best // 4, pack):
                best = max(even)
            elif best == rows and len(cands) > 1:
                best = max(d for d in cands if d != rows)  # at least 2 steps
        return best, True

    # No pack-aligned divisor: accept a ragged last block (masked stores).
    return target_rows, False


def _choose_layout(total, itemsize, pack, max_tile_bytes, n_tc):
    """Pick (rows, cols, tile_rows): lane-dense cols that exactly divide total."""
    best = None
    for cols in (8192, 4096, 2048, 1024, 512, 256, 128):
        if total % cols:
            continue
        rows = total // cols
        tile_rows, exact = _tile_rows_for(
            rows, cols, itemsize, pack, max_tile_bytes, n_tc)
        steps = pl.cdiv(rows, tile_rows)
        steps_ok = (
            n_tc == 1
            or (steps >= 2 and steps % 2 == 0)
            or (steps == 1 and rows <= pack)  # tensor too small to split
        )
        tile_bytes = tile_rows * cols * itemsize
        score = (exact, steps_ok, min(tile_bytes, max_tile_bytes), cols)
        if best is None or score > best[0]:
            best = (score, rows, cols, tile_rows)
    if best is None:
        return None
    return best[1], best[2], best[3]


def relu_pallas(x: jax.Array) -> jax.Array:
    """Elementwise ReLU on an NCHW tensor via a Pallas TPU kernel."""
    orig_shape = x.shape
    total = x.size
    if total == 0:
        return x

    itemsize = jnp.dtype(x.dtype).itemsize
    # Sublane-packing multiple: 8 rows for 32-bit, 16 for bf16, 32 for int8.
    pack = max(8, 32 // itemsize)

    n_tc, vmem_bytes = _chip_params()
    # in + out, each double-buffered => ~4x tile bytes of VMEM. Keep the tile
    # at most 1/16 of physical VMEM (4 MiB on v7x's 64 MiB, 8 MiB elsewhere,
    # further capped by the 4 MiB target).
    max_tile_bytes = max(pack * 128 * itemsize,
                         min(_TARGET_BLOCK_BYTES, vmem_bytes // 16))

    layout = _choose_layout(total, itemsize, pack, max_tile_bytes, n_tc)
    if layout is None:
        # TODO(synk): sizes not divisible by 128 (never the case for these
        # conv activations) fall back to plain XLA.
        return jnp.maximum(x, jnp.zeros((), dtype=x.dtype))
    rows, cols, tile_rows = layout

    # Exact factorization of a contiguous array -> metadata-only reshape.
    x2d = x.reshape(rows, cols)
    grid = (pl.cdiv(rows, tile_rows),)

    # Scoped-VMEM limit sized against the real footprint (with 2x headroom),
    # never above half the physical VMEM of this generation.
    buf_bytes = 4 * tile_rows * cols * itemsize
    vmem_limit = int(min(max(32 << 20, 2 * buf_bytes), vmem_bytes // 2))

    out2d = pl.pallas_call(
        _relu_kernel,
        out_shape=jax.ShapeDtypeStruct((rows, cols), x.dtype),
        grid_spec=pltpu.PrefetchScalarGridSpec(
            num_scalar_prefetch=0,
            grid=grid,
            in_specs=[pl.BlockSpec((tile_rows, cols), lambda i: (i, 0))],
            out_specs=pl.BlockSpec((tile_rows, cols), lambda i: (i, 0)),
        ),
        compiler_params=pltpu.CompilerParams(
            dimension_semantics=("parallel",),
            vmem_limit_bytes=vmem_limit,
        ),
        cost_estimate=pl.CostEstimate(
            flops=total,
            transcendentals=0,
            bytes_accessed=2 * total * itemsize,
        ),
        # Mirror PyTorch ReLU(inplace=True): let XLA reuse the input buffer
        # (true reuse only if the caller donates x at the jit boundary).
        input_output_aliases={0: 0},
    )(x2d)

    return out2d.reshape(orig_shape)  # metadata-only


if __name__ == "__main__":
    # Small NCHW shape consistent with the module's activation input
    # (original was [1, 128, 112, 112]; spatial dims scaled down).
    key = jax.random.PRNGKey(0)
    x8 = jax.random.normal(key, (1, 128, 16, 16), dtype=jnp.float32)

    # Reference first (the kernel aliases its input buffer).
    ref = jnp.maximum(x8, 0.0)

    y = relu_pallas(x8)
    jax.block_until_ready(y)

    assert y.shape == x8.shape and y.dtype == x8.dtype
    assert jnp.array_equal(y, ref)

    print("KERNEL_OK")
</pallas_src>

<mosaic_0001>
module attributes {stable_mosaic.version = 11 : i64} {
  func.func @_relu_kernel(%arg0: i32, %arg1: memref<4x8192xf32, #tpu.memory_space<vmem>>, %arg2: memref<4x8192xf32, #tpu.memory_space<vmem>>) attributes {dimension_semantics = [#tpu.dimension_semantics<parallel>], iteration_bounds = array<i64: 1>, scalar_prefetch = 0 : i64, scratch_operands = 0 : i64, tpu.core_type = #tpu.core_type<tc>, window_params = [{transform_indices = @transform_0, window_bounds = array<i64: 4, 8192>}, {transform_indices = @transform_1, window_bounds = array<i64: 4, 8192>}]} {
    %c0 = arith.constant 0 : index
    %c0_0 = arith.constant 0 : index
    %0 = vector.load %arg1[%c0, %c0_0] : memref<4x8192xf32, #tpu.memory_space<vmem>>, vector<4x8192xf32>
    %cst = arith.constant 0.000000e+00 : f32
    %1 = vector.broadcast %cst : f32 to vector<4x8192xf32>
    %2 = arith.maximumf %0, %1 : vector<4x8192xf32>
    %c0_1 = arith.constant 0 : index
    %c0_2 = arith.constant 0 : index
    %3 = vector.load %arg2[%c0_1, %c0_2] : memref<4x8192xf32, #tpu.memory_space<vmem>>, vector<4x8192xf32>
    tpu.vector_store %arg2[%c0_1, %c0_2], %2 {strides = array<i32>} : memref<4x8192xf32, #tpu.memory_space<vmem>>, vector<4x8192xf32>,
    return
  }
  func.func @transform_0(%arg0: i32) -> (i32, i32) {
    %c0_i32 = arith.constant 0 : i32
    %c0_i32_0 = arith.constant 0 : i32
    return %arg0, %c0_i32 : i32, i32
  }
  func.func @transform_1(%arg0: i32) -> (i32, i32) {
    %c0_i32 = arith.constant 0 : i32
    %c0_i32_0 = arith.constant 0 : i32
    return %arg0, %c0_i32 : i32, i32
  }
}

</mosaic_0001>

<llo_original>
// kernel: tpu_custom_call.1
$region0: #{tpu_custom_call.1}
  #allocation0 [shape = 'u32[]', space=smem, size = 0x4, offset = 0x4, fixed_abs, tag = 'smem constant byte address 0x4 - core index']
  #allocation1 [shape = 'u32[144,128]{1,0:T(1,128)}', space=vmem, size = 0x12000, scoped, tag = 'internal scratch']
  %s0 = inlined_call_operand.hbm [shape: f32[4,8192], index: 0, kind: input, shape index: {}, may-alias: {0,1}]
  %s1 = inlined_call_operand.hbm [shape: f32[4,8192], index: 1, kind: output, shape index: {}, may-alias: {0,1}]
  %s2 = sld [smem:[#allocation0]]
  $region18: #{tpu_custom_call.1} parent=0
    _
  %s4 = ssub.s32 1, %s2
  %s5 = scalar_select 0, %s4, %s2
  $region1: #{tpu_custom_call.1} parent=0
    #allocation2 [shape = 'u8[131072]{0}', space=vmem, size = 0x20000, scoped, tag = 'input window, operand 0, single buffered']
    #allocation3 [shape = 's32[1]{0}', space=sflag, size = 0x4, scoped, tag = 'scoped memory for tpu_custom_call.1']
    #allocation4 [shape = 's32[1]{0}', space=sflag, size = 0x4, scoped, tag = 'scoped memory for tpu_custom_call.1']
    #allocation5 [shape = 'u8[131072]{0}', space=vmem, size = 0x20000, scoped, tag = 'output window, operand 0, single buffered']
    %6 = vsyncpa [#allocation3], 0
    %7 = vsyncpa [#allocation4], 0
    // Predicated region
    $region2: #{tpu_custom_call.1} parent=1 // pred_check
      _
    $region3: #{tpu_custom_call.1} parent=1 // pred_check_branch
      %9 = sbr.rel (0) target = $region5
    $region4: #{tpu_custom_call.1} parent=1 // pred_region
      %s11 = ssub.s32 4096, 4096
      %12 = vsyncadd [#allocation3], %s11
      %s14 = sshll.u32 [#allocation2], 4
      %s15 = int_to_ptr.vmem [resolvable:$true] %s14
      %17 = dma.hbm_to_vmem [thread:$0]  %s0, 4096, %s15, [#allocation3]
    $region5: #{tpu_custom_call.1} parent=1 // pred_fallthru
      _
    // Predicated region
    $region6: #{tpu_custom_call.1} parent=1 // pred_check
      _
    $region7: #{tpu_custom_call.1} parent=1 // pred_check_branch
      %19 = sbr.rel (0) target = $region9
    $region8: #{tpu_custom_call.1} parent=1 // pred_region
      %20 = dma.done [#allocation3], 4096
    $region9: #{tpu_custom_call.1} parent=1 // pred_fallthru
      _
    %v21 = vld [vmem:[#allocation2] sm:$0xff]
    %v22 = vld [vmem:[#allocation2 + $0x8] sm:$0xff]
    %v23 = vld [vmem:[#allocation2 + $0x10] sm:$0xff]
    %v24 = vld [vmem:[#allocation2 + $0x18] sm:$0xff]
    %v25 = vld [vmem:[#allocation2 + $0x20] sm:$0xff]
    %v26 = vld [vmem:[#allocation2 + $0x28] sm:$0xff]
    %v27 = vld [vmem:[#allocation2 + $0x30] sm:$0xff]
    %v28 = vld [vmem:[#allocation2 + $0x38] sm:$0xff]
    %v29 = vld [vmem:[#allocation2 + $0x40] sm:$0xff]
    %v30 = vld [vmem:[#allocation2 + $0x48] sm:$0xff]
    %v31 = vld [vmem:[#allocation2 + $0x50] sm:$0xff]
    %v32 = vld [vmem:[#allocation2 + $0x58] sm:$0xff]
    %v33 = vld [vmem:[#allocation2 + $0x60] sm:$0xff]
    %v34 = vld [vmem:[#allocation2 + $0x68] sm:$0xff]
    %v35 = vld [vmem:[#allocation2 + $0x70] sm:$0xff]
    %v36 = vld [vmem:[#allocation2 + $0x78] sm:$0xff]
    %v37 = vld [vmem:[#allocation2 + $0x80] sm:$0xff]
    %v38 = vld [vmem:[#allocation2 + $0x88] sm:$0xff]
    %v39 = vld [vmem:[#allocation2 + $0x90] sm:$0xff]
    %v40 = vld [vmem:[#allocation2 + $0x98] sm:$0xff]
    %v41 = vld [vmem:[#allocation2 + $0xa0] sm:$0xff]
    %v42 = vld [vmem:[#allocation2 + $0xa8] sm:$0xff]
    %v43 = vld [vmem:[#allocation2 + $0xb0] sm:$0xff]
    %v44 = vld [vmem:[#allocation2 + $0xb8] sm:$0xff]
    %v45 = vld [vmem:[#allocation2 + $0xc0] sm:$0xff]
    %v46 = vld [vmem:[#allocation2 + $0xc8] sm:$0xff]
    %v47 = vld [vmem:[#allocation2 + $0xd0] sm:$0xff]
    %v48 = vld [vmem:[#allocation2 + $0xd8] sm:$0xff]
    %v49 = vld [vmem:[#allocation2 + $0xe0] sm:$0xff]
    %v50 = vld [vmem:[#allocation2 + $0xe8] sm:$0xff]
    %v51 = vld [vmem:[#allocation2 + $0xf0] sm:$0xff]
    %v52 = vld [vmem:[#allocation2 + $0xf8] sm:$0xff]
    %v53 = vmax.f32 %v21, 0.0
    %v54 = vmax.f32 %v22, 0.0
    %v55 = vmax.f32 %v23, 0.0
    %v56 = vmax.f32 %v24, 0.0
    %v57 = vmax.f32 %v25, 0.0
    %v58 = vmax.f32 %v26, 0.0
    %v59 = vmax.f32 %v27, 0.0
    %v60 = vmax.f32 %v28, 0.0
    %v61 = vmax.f32 %v29, 0.0
    %v62 = vmax.f32 %v30, 0.0
    %v63 = vmax.f32 %v31, 0.0
    %v64 = vmax.f32 %v32, 0.0
    %v65 = vmax.f32 %v33, 0.0
    %v66 = vmax.f32 %v34, 0.0
    %v67 = vmax.f32 %v35, 0.0
    %v68 = vmax.f32 %v36, 0.0
    %v69 = vmax.f32 %v37, 0.0
    %v70 = vmax.f32 %v38, 0.0
    %v71 = vmax.f32 %v39, 0.0
    %v72 = vmax.f32 %v40, 0.0
    %v73 = vmax.f32 %v41, 0.0
    %v74 = vmax.f32 %v42, 0.0
    %v75 = vmax.f32 %v43, 0.0
    %v76 = vmax.f32 %v44, 0.0
    %v77 = vmax.f32 %v45, 0.0
    %v78 = vmax.f32 %v46, 0.0
    %v79 = vmax.f32 %v47, 0.0
    %v80 = vmax.f32 %v48, 0.0
    %v81 = vmax.f32 %v49, 0.0
    %v82 = vmax.f32 %v50, 0.0
    %v83 = vmax.f32 %v51, 0.0
    %v84 = vmax.f32 %v52, 0.0
    %85 = vst [vmem:[#allocation5] sm:$0xff] %v53
    %86 = vst [vmem:[#allocation5 + $0x8] sm:$0xff] %v54
    %87 = vst [vmem:[#allocation5 + $0x10] sm:$0xff] %v55
    %88 = vst [vmem:[#allocation5 + $0x18] sm:$0xff] %v56
    %89 = vst [vmem:[#allocation5 + $0x20] sm:$0xff] %v57
    %90 = vst [vmem:[#allocation5 + $0x28] sm:$0xff] %v58
    %91 = vst [vmem:[#allocation5 + $0x30] sm:$0xff] %v59
    %92 = vst [vmem:[#allocation5 + $0x38] sm:$0xff] %v60
    %93 = vst [vmem:[#allocation5 + $0x40] sm:$0xff] %v61
    %94 = vst [vmem:[#allocation5 + $0x48] sm:$0xff] %v62
    %95 = vst [vmem:[#allocation5 + $0x50] sm:$0xff] %v63
    %96 = vst [vmem:[#allocation5 + $0x58] sm:$0xff] %v64
    %97 = vst [vmem:[#allocation5 + $0x60] sm:$0xff] %v65
    %98 = vst [vmem:[#allocation5 + $0x68] sm:$0xff] %v66
    %99 = vst [vmem:[#allocation5 + $0x70] sm:$0xff] %v67
    %100 = vst [vmem:[#allocation5 + $0x78] sm:$0xff] %v68
    %101 = vst [vmem:[#allocation5 + $0x80] sm:$0xff] %v69
    %102 = vst [vmem:[#allocation5 + $0x88] sm:$0xff] %v70
    %103 = vst [vmem:[#allocation5 + $0x90] sm:$0xff] %v71
    %104 = vst [vmem:[#allocation5 + $0x98] sm:$0xff] %v72
    %105 = vst [vmem:[#allocation5 + $0xa0] sm:$0xff] %v73
    %106 = vst [vmem:[#allocation5 + $0xa8] sm:$0xff] %v74
    %107 = vst [vmem:[#allocation5 + $0xb0] sm:$0xff] %v75
    %108 = vst [vmem:[#allocation5 + $0xb8] sm:$0xff] %v76
    %109 = vst [vmem:[#allocation5 + $0xc0] sm:$0xff] %v77
    %110 = vst [vmem:[#allocation5 + $0xc8] sm:$0xff] %v78
    %111 = vst [vmem:[#allocation5 + $0xd0] sm:$0xff] %v79
    %112 = vst [vmem:[#allocation5 + $0xd8] sm:$0xff] %v80
    %113 = vst [vmem:[#allocation5 + $0xe0] sm:$0xff] %v81
    %114 = vst [vmem:[#allocation5 + $0xe8] sm:$0xff] %v82
    %115 = vst [vmem:[#allocation5 + $0xf0] sm:$0xff] %v83
    %116 = vst [vmem:[#allocation5 + $0xf8] sm:$0xff] %v84
    // Predicated region
    $region10: #{tpu_custom_call.1} parent=1 // pred_check
      _
    $region11: #{tpu_custom_call.1} parent=1 // pred_check_branch
      %118 = sbr.rel (0) target = $region13
    $region12: #{tpu_custom_call.1} parent=1 // pred_region
      %s120 = ssub.s32 4096, 4096
      %121 = vsyncadd [#allocation4], %s120
      %s123 = sshll.u32 [#allocation5], 4
      %s124 = int_to_ptr.vmem [resolvable:$true] %s123
      %126 = dma.vmem_to_hbm [thread:$0]  %s124, 4096, %s1, [#allocation4]
    $region13: #{tpu_custom_call.1} parent=1 // pred_fallthru
      _
    // Predicated region
    $region14: #{tpu_custom_call.1} parent=1 // pred_check
      _
    $region15: #{tpu_custom_call.1} parent=1 // pred_check_branch
      %128 = sbr.rel (0) target = $region17
    $region16: #{tpu_custom_call.1} parent=1 // pred_region
      %129 = dma.done [#allocation4], 4096
    $region17: #{tpu_custom_call.1} parent=1 // pred_fallthru
      _
    %130 = vsyncpa [#allocation3], 1
    %131 = vsyncpa [#allocation4], 1

</llo_original>
